<compile_context>
chip_gen: v7x
topology: tpu7x:2x2x1
jax: 0.10.0
libtpu: 0.0.40
codegen_flags: <defaults>
</compile_context>

<pallas_src>
import functools

import jax
import jax.numpy as jnp
from jax import lax
from jax.experimental import pallas as pl
from jax.experimental.pallas import tpu as pltpu


def _round_up(x, m):
    return (x + m - 1) // m * m


def _cdiv(a, b):
    return -(-a // b)


# ---------------- Kernel 1: streamed per-graph segment sum -------------------

def _segment_sum_kernel(starts_ref, ends_ref, x_ref, part_ref,
                        acc_ref, giota_ref, riota_ref, *, n_valid):
    # starts_ref/ends_ref : (Gp, 1) int32   per-graph node range [start, end)
    # x_ref               : (tile_n, D)     streamed node-embedding block
    # part_ref            : (Gp, D) f32     per-split partial sums (resident)
    # acc_ref             : (Gp, D) f32     VMEM accumulator
    # giota_ref           : (Gp, tile_n) i32  hoisted lane iota (built at k==0)
    # riota_ref           : (tile_n, 1)  i32  hoisted row  iota (built at k==0)
    s = pl.program_id(0)
    k = pl.program_id(1)
    n_tiles = pl.num_programs(1)
    tile_n = x_ref.shape[0]

    @pl.when(k == 0)
    def _init():
        acc_ref[...] = jnp.zeros_like(acc_ref)
        giota_ref[...] = lax.broadcasted_iota(jnp.int32, giota_ref.shape, 1)
        riota_ref[...] = lax.broadcasted_iota(jnp.int32, riota_ref.shape, 0)

    # Nominal global row offset of this tile.  For the clamped duplicate tiles
    # of the last split (and the ragged tail) offset-based masking below makes
    # their contribution exactly zero.
    offset = (s * n_tiles + k) * tile_n

    # Zero ragged / out-of-bounds rows: OOB rows hold undefined data and
    # mask * NaN would still be NaN, so they must be explicitly cleared.
    x = jnp.where(riota_ref[...] < (n_valid - offset), x_ref[...], 0.0)

    # Node (offset + i) belongs to graph g iff starts[g] <= offset+i < ends[g]
    #   <=>  starts[g]-offset <= i < ends[g]-offset.
    # Shift the (Gp,1) bounds (cheap) instead of the (Gp,tile_n) iota (hoisted).
    lo = starts_ref[...] - offset
    hi = ends_ref[...] - offset
    mask = jnp.logical_and(giota_ref[...] >= lo,
                           giota_ref[...] < hi).astype(x.dtype)

    # Segment-sum contribution of this tile: (Gp, tile_n) @ (tile_n, D) on MXU.
    acc_ref[...] += jnp.dot(mask, x, preferred_element_type=jnp.float32)

    @pl.when(k == n_tiles - 1)
    def _store():
        part_ref[...] = acc_ref[...]


# ---------------- Kernel 2: combine partials + 2-layer MLP (mish) ------------

def _mlp_kernel(part_ref, w1_ref, b1_ref, w2_ref, b2_ref, o_ref):
    agg = jnp.sum(part_ref[...], axis=0)                      # (Gp, D) f32
    h = jnp.dot(agg, w1_ref[...],
                preferred_element_type=jnp.float32) + b1_ref[...]
    h = h * jnp.tanh(jax.nn.softplus(h))                      # mish (f32 VPU/EUP)
    out = jnp.dot(h, w2_ref[...],
                  preferred_element_type=jnp.float32) + b2_ref[...]
    o_ref[...] = out.astype(o_ref.dtype)


# ---------------- Wrapper -----------------------------------------------------

def sum_readout(node_embeddings, node_sizes, w1, b1, w2, b2,
                *, tile_n=None, n_splits=2, target_block_bytes=1 << 20):
    """SumReadout forward.

    node_embeddings: (N, D); node_sizes: (G,) int (contiguous segments).
    w1: (D, D) = torch W1^T, b1: (D,), w2: (D, O) = torch W2^T, b2: (O,).
    """
    N, D = node_embeddings.shape
    G = node_sizes.shape[0]
    O = w2.shape[1]
    x = node_embeddings                       # streamed directly, no pad/cast copy
    itemsize = jnp.dtype(x.dtype).itemsize

    # Sublane / lane dense padded sizes.
    g_pad = _round_up(max(G, 8), 8)           # sublane-dense graph rows
    o_pad = _round_up(max(O, 128), 128)       # lane-dense output (unmasked vst)

    # Tile size chosen by BYTES (~1 MiB x blocks amortize the ~0.35us/step
    # overhead), kept a multiple of 8 sublanes and never exceeding N.
    if tile_n is None:
        tile_n = max(512, (target_block_bytes // (D * itemsize)) // 512 * 512)
    if N >= 8:
        tile_n = min(tile_n, (N // 8) * 8)
        tile_n = _round_up(tile_n, 8)
    else:
        tile_n = N
    tile_n = max(int(tile_n), 1)

    total_tiles = _cdiv(N, tile_n)
    n_splits = max(1, min(n_splits, total_tiles))   # 2 -> both v7x TensorCores
    tiles_per_split = _cdiv(total_tiles, n_splits)
    last_tile = total_tiles - 1

    # Per-graph contiguous node ranges; padded graphs get an empty [0, 0) range
    # -> zero aggregate -> bias-only MLP rows, sliced off at the end.
    sizes = node_sizes.astype(jnp.int32)
    ends = jnp.cumsum(sizes)
    starts = ends - sizes
    starts_p = jnp.zeros((g_pad, 1), jnp.int32).at[:G, 0].set(starts)
    ends_p = jnp.zeros((g_pad, 1), jnp.int32).at[:G, 0].set(ends)

    def x_index_map(s, k):
        # Clamp so no block is ever fully out of bounds; nominal-OOB duplicate
        # tiles are zeroed in-kernel via the offset arithmetic.
        return (jnp.minimum(s * tiles_per_split + k, last_tile), 0)

    resident2 = lambda s, k: (0, 0)

    seg_cost = pl.CostEstimate(
        flops=2 * g_pad * (n_splits * tiles_per_split * tile_n) * D,
        transcendentals=0,
        bytes_accessed=int(N * D * itemsize + n_splits * g_pad * D * 4
                           + 2 * g_pad * 4),
    )

    partials = pl.pallas_call(
        functools.partial(_segment_sum_kernel, n_valid=N),
        out_shape=jax.ShapeDtypeStruct((n_splits, g_pad, D), jnp.float32),
        grid=(n_splits, tiles_per_split),
        in_specs=[
            pl.BlockSpec((g_pad, 1), resident2),           # starts (vector path)
            pl.BlockSpec((g_pad, 1), resident2),           # ends
            pl.BlockSpec((tile_n, D), x_index_map),        # x tile (double-buffered)
        ],
        out_specs=pl.BlockSpec((None, g_pad, D), lambda s, k: (s, 0, 0)),
        scratch_shapes=[
            pltpu.VMEM((g_pad, D), jnp.float32),           # accumulator
            pltpu.VMEM((g_pad, tile_n), jnp.int32),        # hoisted lane iota
            pltpu.VMEM((tile_n, 1), jnp.int32),            # hoisted row iota
        ],
        compiler_params=pltpu.CompilerParams(
            dimension_semantics=("parallel", "arbitrary"),  # split N across TCs
            vmem_limit_bytes=32 * 1024 * 1024,
        ),
        cost_estimate=seg_cost,
    )(starts_p, ends_p, x)

    # MLP weights (tiny relative to x); O padded to a lane-dense 128 multiple.
    w1_p = w1.astype(jnp.float32)
    b1_p = b1.reshape(1, D).astype(jnp.float32)
    w2_p = jnp.zeros((D, o_pad), jnp.float32).at[:, :O].set(w2.astype(jnp.float32))
    b2_p = jnp.zeros((1, o_pad), jnp.float32).at[0, :O].set(b2.astype(jnp.float32))

    mlp_cost = pl.CostEstimate(
        flops=2 * g_pad * D * D + 2 * g_pad * D * o_pad,
        transcendentals=3 * g_pad * D,
        bytes_accessed=int((n_splits * g_pad * D + D * D + D * o_pad
                            + D + o_pad + g_pad * o_pad) * 4),
    )

    out_padded = pl.pallas_call(
        _mlp_kernel,
        out_shape=jax.ShapeDtypeStruct((g_pad, o_pad), jnp.float32),
        grid=(1,),
        in_specs=[
            pl.BlockSpec((n_splits, g_pad, D), lambda i: (0, 0, 0)),
            pl.BlockSpec((D, D), lambda i: (0, 0)),
            pl.BlockSpec((1, D), lambda i: (0, 0)),
            pl.BlockSpec((D, o_pad), lambda i: (0, 0)),
            pl.BlockSpec((1, o_pad), lambda i: (0, 0)),
        ],
        out_specs=pl.BlockSpec((g_pad, o_pad), lambda i: (0, 0)),
        compiler_params=pltpu.CompilerParams(
            dimension_semantics=("arbitrary",),
            vmem_limit_bytes=32 * 1024 * 1024,
        ),
        cost_estimate=mlp_cost,
    )(partials, w1_p, b1_p, w2_p, b2_p)

    # Rows >= G are padded (bias-only) graphs; slice them off.
    return out_padded[:G, :O]


def sum_readout_ref(node_embeddings, node_sizes, w1, b1, w2, b2):
    # Pure-JAX f32 reference mirroring the PyTorch forward exactly.
    cumsum_indices = jnp.cumsum(node_sizes) - 1
    cumsum_states = jnp.cumsum(node_embeddings, axis=0)[cumsum_indices]
    aggregated = jnp.concatenate(
        [cumsum_states[0:1], cumsum_states[1:] - cumsum_states[:-1]], axis=0)
    h = aggregated @ w1 + b1
    h = h * jnp.tanh(jax.nn.softplus(h))
    return h @ w2 + b2


if __name__ == "__main__":
    key = jax.random.PRNGKey(0)
    k_x, k_w1, k_b1, k_w2, k_b2 = jax.random.split(key, 5)

    N, D, G, O = 64, 32, 6, 8                       # nodes, input_size, graphs, output_size
    node_sizes = jnp.array([5, 9, 10, 8, 12, 20], dtype=jnp.int32)   # sums to N

    node_embeddings = jax.random.normal(k_x, (N, D), dtype=jnp.float32)

    # PyTorch-Linear-style init (uniform in [-1/sqrt(fan_in), 1/sqrt(fan_in)]).
    bound1 = 1.0 / (D ** 0.5)
    w1 = jax.random.uniform(k_w1, (D, D), jnp.float32, -bound1, bound1)   # = torch W1^T
    b1 = jax.random.uniform(k_b1, (D,), jnp.float32, -bound1, bound1)
    w2 = jax.random.uniform(k_w2, (D, O), jnp.float32, -bound1, bound1)   # = torch W2^T
    b2 = jax.random.uniform(k_b2, (O,), jnp.float32, -bound1, bound1)

    ref = sum_readout_ref(node_embeddings, node_sizes, w1, b1, w2, b2)

    # 1) Small tiles: exercises multi-tile accumulation AND the 2-way N split.
    out_small = sum_readout(node_embeddings, node_sizes, w1, b1, w2, b2, tile_n=16)
    out_small = jax.block_until_ready(out_small)
    assert out_small.shape == (G, O)
    assert jnp.allclose(out_small, ref, atol=2e-2, rtol=2e-2), (
        f"max abs err {float(jnp.max(jnp.abs(out_small - ref)))}")

    # 2) Default byte-sized tiles (single tile at this N).
    out_auto = sum_readout(node_embeddings, node_sizes, w1, b1, w2, b2)
    out_auto = jax.block_until_ready(out_auto)
    assert jnp.allclose(out_auto, ref, atol=2e-2, rtol=2e-2), (
        f"max abs err {float(jnp.max(jnp.abs(out_auto - ref)))}")

    # 3) Ragged N (not a multiple of tile_n): exercises in-kernel tail zeroing.
    N2 = 60
    node_sizes2 = jnp.array([5, 9, 10, 8, 12, 16], dtype=jnp.int32)     # sums to 60
    x2 = node_embeddings[:N2]
    ref2 = sum_readout_ref(x2, node_sizes2, w1, b1, w2, b2)
    out2 = sum_readout(x2, node_sizes2, w1, b1, w2, b2, tile_n=16)
    out2 = jax.block_until_ready(out2)
    assert jnp.allclose(out2, ref2, atol=2e-2, rtol=2e-2), (
        f"max abs err {float(jnp.max(jnp.abs(out2 - ref2)))}")

    print("KERNEL_OK")
</pallas_src>

<mosaic_0001>
module attributes {stable_mosaic.version = 11 : i64} {
  func.func @_segment_sum_kernel(%arg0: i32, %arg1: i32, %arg2: memref<8x1xi32, #tpu.memory_space<vmem>>, %arg3: memref<8x1xi32, #tpu.memory_space<vmem>>, %arg4: memref<16x32xf32, #tpu.memory_space<vmem>>, %arg5: memref<1x8x32xf32, #tpu.memory_space<vmem>>, %arg6: memref<8x32xf32, #tpu.memory_space<vmem>>, %arg7: memref<8x16xi32, #tpu.memory_space<vmem>>, %arg8: memref<16x1xi32, #tpu.memory_space<vmem>>) attributes {dimension_semantics = [#tpu.dimension_semantics<parallel>, #tpu.dimension_semantics<arbitrary>], iteration_bounds = array<i64: 2, 2>, scalar_prefetch = 0 : i64, scratch_operands = 3 : i64, tpu.core_type = #tpu.core_type<tc>, window_params = [{pipeline_mode = #tpu.pipeline_mode<synchronous>, transform_indices = @transform_0, window_bounds = array<i64: 8, 1>}, {pipeline_mode = #tpu.pipeline_mode<synchronous>, transform_indices = @transform_1, window_bounds = array<i64: 8, 1>}, {transform_indices = @transform_2, window_bounds = array<i64: 16, 32>}, {transform_indices = @transform_3, window_bounds = array<i64: 1, 8, 32>}]} {
    %c0_i32 = arith.constant 0 : i32
    %0 = arith.cmpi eq, %arg1, %c0_i32 : i32
    %1 = arith.extui %0 : i1 to i32
    %c0_i32_0 = arith.constant 0 : i32
    %2 = arith.cmpi ne, %1, %c0_i32_0 : i32
    scf.if %2 {
      %cst_18 = arith.constant 0.000000e+00 : f32
      %37 = vector.broadcast %cst_18 : f32 to vector<8x32xf32>
      %c0_19 = arith.constant 0 : index
      %c0_20 = arith.constant 0 : index
      %38 = vector.load %arg6[%c0_19, %c0_20] : memref<8x32xf32, #tpu.memory_space<vmem>>, vector<8x32xf32>
      tpu.vector_store %arg6[%c0_19, %c0_20], %37 {strides = array<i32>} : memref<8x32xf32, #tpu.memory_space<vmem>>, vector<8x32xf32>,
      %39 = tpu.iota {dimensions = array<i32: 1>} : vector<8x16xi32>
      %c0_21 = arith.constant 0 : index
      %c0_22 = arith.constant 0 : index
      %40 = vector.load %arg7[%c0_21, %c0_22] : memref<8x16xi32, #tpu.memory_space<vmem>>, vector<8x16xi32>
      tpu.vector_store %arg7[%c0_21, %c0_22], %39 {strides = array<i32>} : memref<8x16xi32, #tpu.memory_space<vmem>>, vector<8x16xi32>,
      %41 = tpu.iota {dimensions = array<i32: 0>} : vector<16x1xi32>
      %c0_23 = arith.constant 0 : index
      %c0_24 = arith.constant 0 : index
      %42 = vector.load %arg8[%c0_23, %c0_24] : memref<16x1xi32, #tpu.memory_space<vmem>>, vector<16x1xi32>
      tpu.vector_store %arg8[%c0_23, %c0_24], %41 {strides = array<i32>} : memref<16x1xi32, #tpu.memory_space<vmem>>, vector<16x1xi32>,
    } else {
    }
    %c2_i32 = arith.constant 2 : i32
    %3 = arith.muli %arg0, %c2_i32 : i32
    %4 = arith.addi %3, %arg1 : i32
    %c16_i32 = arith.constant 16 : i32
    %5 = arith.muli %4, %c16_i32 : i32
    %c0 = arith.constant 0 : index
    %c0_1 = arith.constant 0 : index
    %6 = vector.load %arg8[%c0, %c0_1] : memref<16x1xi32, #tpu.memory_space<vmem>>, vector<16x1xi32>
    %c64_i32 = arith.constant 64 : i32
    %7 = arith.subi %c64_i32, %5 : i32
    %8 = vector.broadcast %7 : i32 to vector<16x1xi32>
    %9 = arith.cmpi slt, %6, %8 : vector<16x1xi32>
    %c0_2 = arith.constant 0 : index
    %c0_3 = arith.constant 0 : index
    %10 = vector.load %arg4[%c0_2, %c0_3] : memref<16x32xf32, #tpu.memory_space<vmem>>, vector<16x32xf32>
    %cst = arith.constant 0.000000e+00 : f32
    %11 = vector.shape_cast %9 : vector<16x1xi1> to vector<16x1xi1>
    %12 = vector.broadcast %11 : vector<16x1xi1> to vector<16x32xi1>
    %13 = vector.broadcast %cst : f32 to vector<16x32xf32>
    %14 = arith.select %12, %10, %13 : vector<16x32xi1>, vector<16x32xf32>
    %c0_4 = arith.constant 0 : index
    %c0_5 = arith.constant 0 : index
    %15 = vector.load %arg2[%c0_4, %c0_5] : memref<8x1xi32, #tpu.memory_space<vmem>>, vector<8x1xi32>
    %16 = vector.broadcast %5 : i32 to vector<8x1xi32>
    %17 = arith.subi %15, %16 : vector<8x1xi32>
    %c0_6 = arith.constant 0 : index
    %c0_7 = arith.constant 0 : index
    %18 = vector.load %arg3[%c0_6, %c0_7] : memref<8x1xi32, #tpu.memory_space<vmem>>, vector<8x1xi32>
    %19 = vector.broadcast %5 : i32 to vector<8x1xi32>
    %20 = arith.subi %18, %19 : vector<8x1xi32>
    %c0_8 = arith.constant 0 : index
    %c0_9 = arith.constant 0 : index
    %21 = vector.load %arg7[%c0_8, %c0_9] : memref<8x16xi32, #tpu.memory_space<vmem>>, vector<8x16xi32>
    %22 = vector.broadcast %17 : vector<8x1xi32> to vector<8x16xi32>
    %23 = arith.cmpi sge, %21, %22 : vector<8x16xi32>
    %c0_10 = arith.constant 0 : index
    %c0_11 = arith.constant 0 : index
    %24 = vector.load %arg7[%c0_10, %c0_11] : memref<8x16xi32, #tpu.memory_space<vmem>>, vector<8x16xi32>
    %25 = vector.broadcast %20 : vector<8x1xi32> to vector<8x16xi32>
    %26 = arith.cmpi slt, %24, %25 : vector<8x16xi32>
    %27 = arith.andi %23, %26 : vector<8x16xi1>
    %28 = arith.extui %27 : vector<8x16xi1> to vector<8x16xi32>
    %29 = arith.sitofp %28 : vector<8x16xi32> to vector<8x16xf32>
    %c0_12 = arith.constant 0 : index
    %c0_13 = arith.constant 0 : index
    %30 = vector.load %arg6[%c0_12, %c0_13] : memref<8x32xf32, #tpu.memory_space<vmem>>, vector<8x32xf32>
    %cst_14 = arith.constant dense<0.000000e+00> : vector<8x32xf32>
    %31 = tpu.matmul %29, %14, %cst_14 {dimension_numbers = #tpu.dot_dimension_numbers<[1], [0], [0], [1], [0, 0, 1, 1], [], []>} : vector<8x16xf32>, vector<16x32xf32>, vector<8x32xf32> -> vector<8x32xf32>
    %32 = arith.addf %30, %31 : vector<8x32xf32>
    %c0_15 = arith.constant 0 : index
    %c0_16 = arith.constant 0 : index
    %33 = vector.load %arg6[%c0_15, %c0_16] : memref<8x32xf32, #tpu.memory_space<vmem>>, vector<8x32xf32>
    tpu.vector_store %arg6[%c0_15, %c0_16], %32 {strides = array<i32>} : memref<8x32xf32, #tpu.memory_space<vmem>>, vector<8x32xf32>,
    %c1_i32 = arith.constant 1 : i32
    %34 = arith.cmpi eq, %arg1, %c1_i32 : i32
    %35 = arith.extui %34 : i1 to i32
    %c0_i32_17 = arith.constant 0 : i32
    %36 = arith.cmpi ne, %35, %c0_i32_17 : i32
    scf.if %36 {
      %c0_18 = arith.constant 0 : index
      %c0_19 = arith.constant 0 : index
      %37 = vector.load %arg6[%c0_18, %c0_19] : memref<8x32xf32, #tpu.memory_space<vmem>>, vector<8x32xf32>
      %c0_20 = arith.constant 0 : index
      %c0_21 = arith.constant 0 : index
      %c0_22 = arith.constant 0 : index
      %38 = vector.load %arg5[%c0_20, %c0_21, %c0_22] : memref<1x8x32xf32, #tpu.memory_space<vmem>>, vector<1x8x32xf32>
      %39 = vector.shape_cast %38 : vector<1x8x32xf32> to vector<8x32xf32>
      %40 = vector.shape_cast %37 : vector<8x32xf32> to vector<1x8x32xf32>
      tpu.vector_store %arg5[%c0_20, %c0_21, %c0_22], %40 {strides = array<i32>} : memref<1x8x32xf32, #tpu.memory_space<vmem>>, vector<1x8x32xf32>,
    } else {
    }
    return
  }
  func.func @transform_0(%arg0: i32, %arg1: i32) -> (i32, i32) {
    %c0_i32 = arith.constant 0 : i32
    %c0_i32_0 = arith.constant 0 : i32
    %c0_i32_1 = arith.constant 0 : i32
    return %c0_i32, %c0_i32_0 : i32, i32
  }
  func.func @transform_1(%arg0: i32, %arg1: i32) -> (i32, i32) {
    %c0_i32 = arith.constant 0 : i32
    %c0_i32_0 = arith.constant 0 : i32
    %c0_i32_1 = arith.constant 0 : i32
    return %c0_i32, %c0_i32_0 : i32, i32
  }
  func.func @transform_2(%arg0: i32, %arg1: i32) -> (i32, i32) {
    %c2_i32 = arith.constant 2 : i32
    %0 = arith.muli %arg0, %c2_i32 : i32
    %1 = arith.addi %0, %arg1 : i32
    %c3_i32 = arith.constant 3 : i32
    %2 = arith.minsi %1, %c3_i32 : i32
    %c0_i32 = arith.constant 0 : i32
    %c0_i32_0 = arith.constant 0 : i32
    return %2, %c0_i32 : i32, i32
  }
  func.func @transform_3(%arg0: i32, %arg1: i32) -> (i32, i32, i32) {
    %c0_i32 = arith.constant 0 : i32
    %c0_i32_0 = arith.constant 0 : i32
    %c0_i32_1 = arith.constant 0 : i32
    return %arg0, %c0_i32, %c0_i32_0 : i32, i32, i32
  }
}

</mosaic_0001>

<llo_original>
// kernel: tpu_custom_call.1
$region0: #{tpu_custom_call.1}
  #allocation0 [shape = 'u32[]', space=smem, size = 0x4, offset = 0x4, fixed_abs, tag = 'smem constant byte address 0x4 - core index']
  #allocation1 [shape = 'u32[144,128]{1,0:T(1,128)}', space=vmem, size = 0x12000, scoped, tag = 'internal scratch']
  #allocation2 [shape = 'f32[8,32]{1,0:T(8,128)}', space=vmem, size = 0x1000, scoped, tag = 'scratch operand']
  #allocation3 [shape = 's32[8,16]{1,0:T(8,128)}', space=vmem, size = 0x1000, scoped, tag = 'scratch operand']
  #allocation4 [shape = 's32[16,1]{1,0:T(8,128)}', space=vmem, size = 0x2000, scoped, tag = 'scratch operand']
  %s0 = inlined_call_operand.vmem [shape: s32[8,1], index: 0, kind: input, shape index: {}]
  %s1 = inlined_call_operand.vmem [shape: s32[8,1], index: 1, kind: input, shape index: {}]
  %s2 = inlined_call_operand.vmem [shape: f32[64,32], index: 2, kind: input, shape index: {}]
  %s3 = inlined_call_operand.hbm [shape: f32[2,8,32], index: 3, kind: output, shape index: {}]
  %s4 = sld [smem:[#allocation0]]
  $region53: #{tpu_custom_call.1} parent=0
    _
  %s6 = ssub.s32 1, %s4
  %s7 = scalar_select 0, %s6, %s4
  $region1: #{tpu_custom_call.1} parent=0
    #allocation5 [shape = 'u8[8192]{0}', space=vmem, size = 0x2000, scoped, tag = 'output window, operand 0']
    #allocation6 [shape = 's32[2]{0}', space=sflag, size = 0x8, scoped, tag = 'scoped memory for tpu_custom_call.1']
    %8 = vsyncpa [#allocation6], 0
    %s9 = scalar_lea.sflag [#allocation6], 1
    %10 = vsyncpa %s9, 0
    loop: start=0, step=1, limit=6
    $region2: #{tpu_custom_call.1} parent=1 // loop_pre_header
      _
    $region3: #{tpu_custom_call.1} parent=1 // loop_header
      %s12 = sphi 0, %s16
      %p13 = scmp.ge.s32.totalorder %s12, 6
      %s19 = sphi 0, %s31
      %s20 = sphi 0, %s27
      %s21 = sphi 0, %s19
      %s22 = sphi 0, %s20
      %s23 = sphi 0, %s21
      %s24 = sphi 0, %s22
      %s32 = sphi 0, %s32
      %s34 = sphi 0, %s32
      %s35 = sphi 0, %s34
      %s49 = sphi 0, %s35
      %s53 = sphi 0, %s53
      %s55 = sphi 0, %s53
      %s56 = sphi 0, %s55
      %s70 = sphi 0, %s56
      %s84 = sphi 0, %s86
      %s87 = sphi 0, %s84
      %s88 = sphi 0, %s87
      %s104 = sphi 0, %s88
      %s110 = sphi 0, %s112
      %s113 = sphi 0, %s110
      %s114 = sphi 0, %s113
      %s130 = sphi 0, %s114
    $region4: #{tpu_custom_call.1} parent=1 // loop_header_branch
      %15 = sbr.rel (%p13) target = $region8
    $region5: #{tpu_custom_call.1} parent=1 // loop_body
      %s17 = ssub.s32 %s12, 1
      %s18 = ssub.s32 %s12, 2
      %s25 = sadd.s32 1, %s20
      %p26 = scmp.ge.s32.totalorder %s25, 2
      %s27 = scalar_select %p26, 0, %s25
      %s28 = sadd.s32 1, %s19
      %s29 = scalar_select %p26, %s28, %s19
      %p30 = scmp.ge.s32.totalorder %s29, 2
      %s31 = scalar_select %p30, 0, %s29
      %s33 = sadd.s32 %s32, 1
      %p36 = scmp.eq.s32.totalorder %s12, 3
      %p37 = scmp.ne.s32.totalorder %s32, %s34
      %p38 = scmp.eq.s32.totalorder %s12, 0
      %p39 = por %p37, %p38
      %p40 = scmp.ne.s32.totalorder %s32, %s34
      %p41 = scmp.eq.s32.totalorder %s17, 3
      %p42 = por %p40, %p41
      %p43 = scmp.ne.s32.totalorder %s34, %s35
      %p44 = scmp.eq.s32.totalorder %s17, 0
      %p45 = por %p43, %p44
      %p46 = scmp.ne.s32.totalorder %s34, %s35
      %p47 = scmp.eq.s32.totalorder %s18, 3
      %p48 = por %p46, %p47
      %p50 = scmp.ne.s32.totalorder %s35, %s49
      %p51 = scmp.eq.s32.totalorder %s18, 0
      %p52 = por %p50, %p51
      %s54 = sadd.s32 %s53, 1
      %p57 = scmp.eq.s32.totalorder %s12, 3
      %p58 = scmp.ne.s32.totalorder %s53, %s55
      %p59 = scmp.eq.s32.totalorder %s12, 0
      %p60 = por %p58, %p59
      %p61 = scmp.ne.s32.totalorder %s53, %s55
      %p62 = scmp.eq.s32.totalorder %s17, 3
      %p63 = por %p61, %p62
      %p64 = scmp.ne.s32.totalorder %s55, %s56
      %p65 = scmp.eq.s32.totalorder %s17, 0
      %p66 = por %p64, %p65
      %p67 = scmp.ne.s32.totalorder %s55, %s56
      %p68 = scmp.eq.s32.totalorder %s18, 3
      %p69 = por %p67, %p68
      %p71 = scmp.ne.s32.totalorder %s56, %s70
      %p72 = scmp.eq.s32.totalorder %s18, 0
      %p73 = por %p71, %p72
      %s74 = smul.u32 %s19, 2
      %s75 = sadd.s32 %s74, %s20
      %p76 = scmp.lt.s32.totalorder %s75, 3
      %s77 = scalar_select %p76, %s75, 3
      %s78 = smul.u32 %s31, 2
      %s79 = sadd.s32 %s78, %s27
      %p80 = scmp.lt.s32.totalorder %s79, 3
      %s81 = scalar_select %p80, %s79, 3
      %s82 = ssub.s32 %s77, %s81
      %p83 = scmp.eq.s32.totalorder %s82, 0
      %s85 = sadd.s32 %s84, 1
      %s86 = scalar_select %p83, %s84, %s85
      %p89 = pneg %p83
      %p90 = scmp.eq.s32.totalorder %s12, 3
      %p91 = por %p89, %p90
      %p92 = scmp.ne.s32.totalorder %s84, %s87
      %p93 = scmp.eq.s32.totalorder %s12, 0
      %p94 = por %p92, %p93
      %p95 = scmp.ne.s32.totalorder %s84, %s87
      %p96 = scmp.eq.s32.totalorder %s17, 3
      %p97 = por %p95, %p96
      %p98 = scmp.ne.s32.totalorder %s87, %s88
      %p99 = scmp.eq.s32.totalorder %s17, 0
      %p100 = por %p98, %p99
      %p101 = scmp.ne.s32.totalorder %s87, %s88
      %p102 = scmp.eq.s32.totalorder %s18, 3
      %p103 = por %p101, %p102
      %p105 = scmp.ne.s32.totalorder %s88, %s104
      %p106 = scmp.eq.s32.totalorder %s18, 0
      %p107 = por %p105, %p106
      %s108 = ssub.s32 %s19, %s31
      %p109 = scmp.eq.s32.totalorder %s108, 0
      %s111 = sadd.s32 %s110, 1
      %s112 = scalar_select %p109, %s110, %s111
      %p115 = pneg %p109
      %p116 = scmp.eq.s32.totalorder %s12, 3
      %p117 = por %p115, %p116
      %p118 = scmp.ne.s32.totalorder %s110, %s113
      %p119 = scmp.eq.s32.totalorder %s12, 0
      %p120 = por %p118, %p119
      %p121 = scmp.ne.s32.totalorder %s110, %s113
      %p122 = scmp.eq.s32.totalorder %s17, 3
      %p123 = por %p121, %p122
      %p124 = scmp.ne.s32.totalorder %s113, %s114
      %p125 = scmp.eq.s32.totalorder %s17, 0
      %p126 = por %p124, %p125
      %p127 = scmp.ne.s32.totalorder %s113, %s114
      %p128 = scmp.eq.s32.totalorder %s18, 3
      %p129 = por %p127, %p128
      %p131 = scmp.ne.s32.totalorder %s114, %s130
      %p132 = scmp.eq.s32.totalorder %s18, 0
      %p133 = por %p131, %p132
      %p134 = scmp.le.s32.totalorder 1, %s12
      %p135 = scmp.lt.s32.totalorder %s12, 5
      %p136 = pnand %p134, %p135
      %p137 = pneg %p136
      // Predicated region
      $region9: #{tpu_custom_call.1} parent=5 // pred_check
        _
      $region10: #{tpu_custom_call.1} parent=5 // pred_check_branch
        %139 = sbr.rel (%p136) target = $region12
      $region11: #{tpu_custom_call.1} parent=5 // pred_region
        %s140 = ssub.s32 %s12, 1
        // Predicated region
        $region13: #{tpu_custom_call.1} parent=11 // pred_check
          %p141 = pneg %p45
        $region14: #{tpu_custom_call.1} parent=11 // pred_check_branch
          %143 = sbr.rel (%p141) target = $region16
        $region15: #{tpu_custom_call.1} parent=11 // pred_region
          _
        $region16: #{tpu_custom_call.1} parent=11 // pred_fallthru
          _
        // Predicated region
        $region17: #{tpu_custom_call.1} parent=11 // pred_check
          %p144 = pneg %p66
        $region18: #{tpu_custom_call.1} parent=11 // pred_check_branch
          %146 = sbr.rel (%p144) target = $region20
        $region19: #{tpu_custom_call.1} parent=11 // pred_region
          _
        $region20: #{tpu_custom_call.1} parent=11 // pred_fallthru
          _
      $region12: #{tpu_custom_call.1} parent=5 // pred_fallthru
        _
      %p147 = scmp.lt.s32.totalorder %s12, 4
      // Predicated region
      $region21: #{tpu_custom_call.1} parent=5 // pred_check
        %p148 = pneg %p147
      $region22: #{tpu_custom_call.1} parent=5 // pred_check_branch
        %150 = sbr.rel (%p148) target = $region24
      $region23: #{tpu_custom_call.1} parent=5 // pred_region
        // Predicated region
        $region25: #{tpu_custom_call.1} parent=23 // pred_check
          %p151 = pneg %p94
        $region26: #{tpu_custom_call.1} parent=23 // pred_check_branch
          %153 = sbr.rel (%p151) target = $region28
        $region27: #{tpu_custom_call.1} parent=23 // pred_region
          %s154 = smul.u32 %s19, 2
          %s155 = sadd.s32 %s154, %s20
          %p156 = scmp.lt.s32.totalorder %s155, 3
          %s157 = scalar_select %p156, %s155, 3
          %s158 = smul.u32 2, %s157
          %p159 = scmp.lt.s32.totalorder %s158, 7
          %s160 = scalar_select %p159, %s158, 7
          %s161 = smul.addr %s160, 8
          %s162 = scalar_lea.vmem %s2, %s161
          %s163 = smul.u32 %s19, 2
          %s164 = sadd.s32 %s163, %s20
          %p165 = scmp.lt.s32.totalorder %s164, 3
          %s166 = scalar_select %p165, %s164, 3
          %s167 = smul.u32 2, %s166
        $region28: #{tpu_custom_call.1} parent=23 // pred_fallthru
          _
      $region24: #{tpu_custom_call.1} parent=5 // pred_fallthru
        _
      %p168 = scmp.le.s32.totalorder 1, %s12
      %p169 = scmp.lt.s32.totalorder %s12, 5
      %p170 = pnand %p168, %p169
      %p171 = pneg %p170
      // Predicated region
      $region29: #{tpu_custom_call.1} parent=5 // pred_check
        _
      $region30: #{tpu_custom_call.1} parent=5 // pred_check_branch
        %173 = sbr.rel (%p170) target = $region32
      $region31: #{tpu_custom_call.1} parent=5 // pred_region
        %s174 = ssub.s32 %s12, 1
        %p175 = pneg %p45
        %p176 = pneg %p42
        %p177 = pneg %p66
        %p178 = pneg %p63
        %s179 = smul.u32 %s21, 2
        %s180 = sadd.s32 %s179, %s22
        %p181 = scmp.lt.s32.totalorder %s180, 3
        %s182 = scalar_select %p181, %s180, 3
        %s183 = smul.u32 2, %s182
        %p184 = scmp.lt.s32.totalorder %s183, 7
        %s185 = scalar_select %p184, %s183, 7
        %s186 = smul.addr %s185, 8
        %s187 = scalar_lea.vmem %s2, %s186
        %p188 = pneg %p100
        %p189 = pneg %p97
        %p190 = pneg %p126
        %p191 = pneg %p123
        %s192 = sand.u32 %s113, 1
        %s193 = scalar_lea.sflag [#allocation6], %s192
        %s194 = sand.u32 %s113, 1
        %s195 = smul.addr %s194, 8
        %s196 = scalar_lea.vmem [#allocation5], %s195
        %s197 = smul.u32 %s21, 2
        %s198 = sadd.s32 %s197, %s22
        %p199 = scmp.lt.s32.totalorder %s198, 3
        %s200 = scalar_select %p199, %s198, 3
        %s201 = smul.u32 2, %s200
        %p202 = scmp.lt.s32.totalorder %s201, 7
        %s203 = scalar_select %p202, %s201, 7
        %s204 = smul.addr %s203, 8
        %s205 = scalar_lea.vmem %s2, %s204
        %s206 = smul.u32 %s21, 2
        %s207 = sadd.s32 %s206, %s22
        %p208 = scmp.lt.s32.totalorder %s207, 3
        %s209 = scalar_select %p208, %s207, 3
        %s210 = smul.u32 2, %s209
        %p211 = scmp.eq.s32.totalorder %s22, 0
        // Predicated region
        $region33: #{tpu_custom_call.1} parent=31 // pred_check
          %p212 = pneg %p211
        $region34: #{tpu_custom_call.1} parent=31 // pred_check_branch
          %214 = sbr.rel (%p212) target = $region36
        $region35: #{tpu_custom_call.1} parent=31 // pred_region
          %vm215 = vcmask 261120
          %216 = vst.msk [vmem:[#allocation2] sm:$0xff] %vm215, 0.0
          %v217 = vlaneseq
          %v218 = vand.u32 %v217, 127
          %vm219 = vcmask 130048
          %220 = vst.msk [vmem:[#allocation3] sm:$0xff] %vm219, %v218
          %v221 = vlaneseq
          %v222 = vshrl.u32 %v221, 7
          %v223 = vadd.s32 %v222, 8
          %vm224 = vcmask 7168
          %225 = vst.msk [vmem:[#allocation4] sm:$0xff] %vm224, %v222
          %226 = vst.msk [vmem:[#allocation4 + $0x8] sm:$0xff] %vm224, %v223
        $region36: #{tpu_custom_call.1} parent=31 // pred_fallthru
          _
        %s227 = smul.u32 %s21, 2
        %s228 = sadd.s32 %s227, %s22
        %s229 = smul.u32 %s228, 16
        %v230 = vld [vmem:[#allocation4] sm:$0xff]
        %v231 = vld [vmem:[#allocation4 + $0x8] sm:$0xff]
        %s232 = ssub.s32 64, %s229
        %v233 = vstv %s232
        %vm234 = vcmp.lt.s32.totalorder %v230, %v233
        %vm235 = vcmp.lt.s32.totalorder %v231, %v233
        %v236 = vld [vmem:[%s205] sm:$0xff]
        %v237 = vld [vmem:[%s205 + $0x8] sm:$0xff]
        %v238 = vsel %vm234, 1, 0
        %v239 = vsel %vm235, 1, 0
        %240 = vset.pattern.permute.xlu0 0
        %241 = vperm.xlu0 %240, %v238
        %v242 = vpop.permute.xlu0 %241
        %243 = vset.pattern.permute.xlu0 0
        %244 = vperm.xlu0 %243, %v239
        %v245 = vpop.permute.xlu0 %244
        %vm246 = vcmp.eq.s32.totalorder %v242, 1
        %vm247 = vcmp.eq.s32.totalorder %v245, 1
        %v248 = vsel %vm246, %v236, 0.0
        %v249 = vsel %vm247, %v237, 0.0
        %v250 = vld [vmem:[%s0] sm:$0xff]
        %v251 = vstv %s229
        %v252 = vsub.s32 %v250, %v251
        %v253 = vld [vmem:[%s1] sm:$0xff]
        %v254 = vsub.s32 %v253, %v251
        %v255 = vld [vmem:[#allocation3] sm:$0xff]
        %256 = vset.pattern.permute.xlu0 0
        %257 = vperm.xlu0 %256, %v252
        %v258 = vpop.permute.xlu0 %257
        %vm259 = vcmp.ge.s32.totalorder %v255, %v258
        %260 = vset.pattern.permute.xlu0 0
        %261 = vperm.xlu0 %260, %v254
        %v262 = vpop.permute.xlu0 %261
        %vm263 = vcmp.lt.s32.totalorder %v255, %v262
        %vm264 = vmand %vm259, %vm263
        %v265 = vsel %vm264, 1, 0
        %v266 = vcvt.s32.f32 %v265
        %v267 = vld [vmem:[#allocation2] sm:$0xff]
        %vm268 = vcmask 130048
        %v270 = vsel %vm268, %v266, 0
        %272 = vmatprep.subr.mxu0 0.0
        %273 = vmatpush1.msra.mxu0 %v248
        %274 = vmatprep.subr.mxu0 0.0
        %275 = vmatpush1.msra.mxu0 %v249
        %276 = vmatprep.subr.mxu0 0.0
        %277 = vmatpush1.msra.mxu0 0.0
        %278 = vmatprep.subr.mxu0 0.0
        %279 = vmatpush1.msra.mxu0 0.0
        %280 = vmatprep.subr.mxu0 0.0
        %281 = vmatpush1.msra.mxu0 0.0
        %282 = vmatprep.subr.mxu0 0.0
        %283 = vmatpush1.msra.mxu0 0.0
        %284 = vmatprep.subr.mxu0 0.0
        %285 = vmatpush1.msra.mxu0 0.0
        %286 = vmatprep.subr.mxu0 0.0
        %287 = vmatpush1.msra.mxu0 0.0
        %288 = vmatprep.subr.mxu0 0.0
        %289 = vmatpush1.msra.mxu0 0.0
        %290 = vmatprep.subr.mxu0 0.0
        %291 = vmatpush1.msra.mxu0 0.0
        %292 = vmatprep.subr.mxu0 0.0
        %293 = vmatpush1.msra.mxu0 0.0
        %294 = vmatprep.subr.mxu0 0.0
        %295 = vmatpush1.msra.mxu0 0.0
        %296 = vmatprep.subr.mxu0 0.0
        %297 = vmatpush1.msra.mxu0 0.0
        %298 = vmatprep.subr.mxu0 0.0
        %299 = vmatpush1.msra.mxu0 0.0
        %300 = vmatprep.subr.mxu0 0.0
        %301 = vmatpush1.msra.mxu0 0.0
        %302 = vmatprep.subr.mxu0 0.0
        %303 = vmatpush1.msra.mxu0 0.0
        %304 = vmatprep.subr.mxu0 0.0
        %305 = vmatpush1.msra.mxu0 0.0
        %306 = vmatprep.subr.mxu0 0.0
        %307 = vmatpush1.msra.mxu0 0.0
        %308 = vmatprep.subr.mxu0 0.0
        %309 = vmatpush1.msra.mxu0 0.0
        %310 = vmatprep.subr.mxu0 0.0
        %311 = vmatpush1.msra.mxu0 0.0
        %312 = vmatprep.subr.mxu0 0.0
        %313 = vmatpush1.msra.mxu0 0.0
        %314 = vmatprep.subr.mxu0 0.0
        %315 = vmatpush1.msra.mxu0 0.0
        %316 = vmatprep.subr.mxu0 0.0
        %317 = vmatpush1.msra.mxu0 0.0
        %318 = vmatprep.subr.mxu0 0.0
        %319 = vmatpush1.msra.mxu0 0.0
        %320 = vmatprep.subr.mxu0 0.0
        %321 = vmatpush1.msra.mxu0 0.0
        %322 = vmatprep.subr.mxu0 0.0
        %323 = vmatpush1.msra.mxu0 0.0
        %324 = vmatprep.subr.mxu0 0.0
        %325 = vmatpush1.msra.mxu0 0.0
        %326 = vmatprep.subr.mxu0 0.0
        %327 = vmatpush1.msra.mxu0 0.0
        %328 = vmatprep.subr.mxu0 0.0
        %329 = vmatpush1.msra.mxu0 0.0
        %330 = vmatprep.subr.mxu0 0.0
        %331 = vmatpush1.msra.mxu0 0.0
        %332 = vmatprep.subr.mxu0 0.0
        %333 = vmatpush1.msra.mxu0 0.0
        %334 = vmatprep.subr.mxu0 0.0
        %335 = vmatpush1.msra.mxu0 0.0
        %336 = vmatprep.mubr.f32.mxu0 0.0
        %337 = vmatmul.mubr.f32.gmra.mrb[0].mxu0 %v270
        %v338 = vpop.f32.mrb[0].mxu0
        %v339 = vadd.f32 0.0, %v338
        %v340 = vpop.f32.mrb[0].mxu0
        %341 = vdwg.mxu0
        %v342 = vadd.f32 %v267, %v339
        %vm343 = vcmask 261120
        %344 = vst.msk [vmem:[#allocation2] sm:$0xff] %vm343, %v342
        %p345 = scmp.eq.s32.totalorder %s22, 1
        // Predicated region
        $region37: #{tpu_custom_call.1} parent=31 // pred_check
          %p346 = pneg %p345
        $region38: #{tpu_custom_call.1} parent=31 // pred_check_branch
          %348 = sbr.rel (%p346) target = $region40
        $region39: #{tpu_custom_call.1} parent=31 // pred_region
          %v349 = vld [vmem:[#allocation2] sm:$0xff]
          %350 = vst.msk [vmem:[%s196] sm:$0xff] %vm343, %v349
        $region40: #{tpu_custom_call.1} parent=31 // pred_fallthru
          _
        %s351 = sand.u32 %s113, 1
        %s352 = scalar_lea.sflag [#allocation6], %s351
        %s353 = sand.u32 %s113, 1
        %s354 = smul.addr %s353, 8
        %s355 = scalar_lea.vmem [#allocation5], %s354
        // Predicated region
        $region41: #{tpu_custom_call.1} parent=31 // pred_check
          %p356 = pneg %p123
        $region42: #{tpu_custom_call.1} parent=31 // pred_check_branch
          %358 = sbr.rel (%p356) target = $region44
        $region43: #{tpu_custom_call.1} parent=31 // pred_region
          %s360 = ssub.s32 128, 128
          %361 = vsyncadd %s352, %s360
          %s362 = smul.addr %s21, 128
          %s363 = scalar_lea.hbm %s3, %s362
          %s365 = sshll.u32 %s355, 4
          %s366 = int_to_ptr.vmem [resolvable:$true] %s365
          %368 = dma.vmem_to_hbm [thread:$0]  %s366, 128, %s363, %s352
        $region44: #{tpu_custom_call.1} parent=31 // pred_fallthru
          _
      $region32: #{tpu_custom_call.1} parent=5 // pred_fallthru
        _
      %p369 = scmp.le.s32.totalorder 2, %s12
      // Predicated region
      $region45: #{tpu_custom_call.1} parent=5 // pred_check
        %p370 = pneg %p369
      $region46: #{tpu_custom_call.1} parent=5 // pred_check_branch
        %372 = sbr.rel (%p370) target = $region48
      $region47: #{tpu_custom_call.1} parent=5 // pred_region
        %s373 = ssub.s32 %s12, 2
        // Predicated region
        $region49: #{tpu_custom_call.1} parent=47 // pred_check
          %p374 = pneg %p129
        $region50: #{tpu_custom_call.1} parent=47 // pred_check_branch
          %376 = sbr.rel (%p374) target = $region52
        $region51: #{tpu_custom_call.1} parent=47 // pred_region
          %s377 = sand.u32 %s114, 1
          %s378 = scalar_lea.sflag [#allocation6], %s377
          %s379 = sand.u32 %s114, 1
          %s380 = smul.addr %s379, 8
          %s381 = scalar_lea.vmem [#allocation5], %s380
          %382 = dma.done %s378, 128
        $region52: #{tpu_custom_call.1} parent=47 // pred_fallthru
          _
      $region48: #{tpu_custom_call.1} parent=5 // pred_fallthru
        _
    $region6: #{tpu_custom_call.1} parent=1 // loop_footer
      %s16 = sadd.s32 1, %s12
    $region7: #{tpu_custom_call.1} parent=1 // loop_footer_branch
      %11 = sbr.rel target = $region3
    $region8: #{tpu_custom_call.1} parent=1 // loop_exit
      _
    %383 = vsyncpa [#allocation6], 1
    %s384 = scalar_lea.sflag [#allocation6], 1
    %385 = vsyncpa %s384, 1

</llo_original>
